<compile_context>
chip_gen: v7x
topology: tpu7x:2x2x1
jax: 0.10.0
libtpu: 0.0.40
codegen_flags: <defaults>
</compile_context>

<pallas_src>
import math

import jax
import jax.numpy as jnp
from jax.experimental import pallas as pl
from jax.experimental.pallas import tpu as pltpu


ACTS = {
    "relu": lambda x: jnp.maximum(x, 0.0),
    "sigmoid": jax.nn.sigmoid,
    "tanh": jnp.tanh,
}


def _round_up(n, m):
    return ((n + m - 1) // m) * m


def _vmem_budget_bytes():
    """Best-effort per-core VMEM capacity; conservative v7x (64 MiB) fallback."""
    try:
        cap = int(pltpu.get_tpu_info().vmem_capacity_bytes)
    except Exception:
        cap = 64 * 1024 * 1024
    return max(16 * 1024 * 1024, int(cap * 0.70))


def prepare_params(params, matmul_dtype):
    """Transposed ('batch on lanes') parameter layout.

    Hidden layers: W -> W.T (out, in) in matmul_dtype, b -> (out, 1) f32.
    Final (nodes, 1) layer: W kept (nodes, 1) f32 (sublane-reduce path),
    b -> (1, 1) f32.
    """
    num = len(params)
    out_dim = params[-1][0].shape[1]
    final_as_reduce = out_dim == 1
    prepared = []
    for i, (w, b) in enumerate(params):
        bt = b.reshape(-1, 1).astype(jnp.float32)               # (out, 1)
        if i == num - 1 and final_as_reduce:
            prepared.append((w.astype(jnp.float32), bt))         # (nodes, 1)
        else:
            prepared.append((w.T.astype(matmul_dtype), bt))      # (out, in)
    return prepared, final_as_reduce


def make_mlp_kernel(num_linears, activation, final_as_reduce, matmul_dtype):
    """Fused MLP over one (in_dim, TILE_M) batch tile (batch on lanes)."""
    act = ACTS[activation]

    def kernel(x_ref, *refs):
        # refs = (w0t, b0, w1t, b1, ..., w_{L-1}, b_{L-1}, out)
        o_ref = refs[-1]
        p = refs[:-1]

        h = x_ref[...]                                  # (in_dim, TILE_M)
        for i in range(num_linears - 1):
            wt = p[2 * i][...]                          # (out, in), matmul_dtype
            b = p[2 * i + 1][...]                       # (out, 1), f32
            acc = jnp.dot(wt, h.astype(matmul_dtype),
                          preferred_element_type=jnp.float32)
            h = act(acc + b)                            # (out, TILE_M), f32

        w_last = p[2 * (num_linears - 1)][...]
        b_last = p[2 * (num_linears - 1) + 1][...]
        if final_as_reduce:
            # (nodes, TILE_M) * (nodes, 1) -> sublane reduce -> (1, TILE_M).
            out = jnp.sum(h.astype(jnp.float32) * w_last, axis=0,
                          keepdims=True) + b_last
        else:
            out = jnp.dot(w_last, h.astype(matmul_dtype),
                          preferred_element_type=jnp.float32) + b_last
        o_ref[...] = out.astype(o_ref.dtype)

    return kernel


def _choose_tile_m(batch, in_dim, max_width, x_itemsize, vmem_budget):
    """Largest lane tile that (a) targets ~4 MiB of x per buffer and (b) fits
    double-buffered x/out plus two live f32 activation slabs in VMEM."""
    per_col = (2 * in_dim * x_itemsize      # x, double-buffered
               + 2 * 4                      # out (f32), double-buffered
               + 2 * max_width * 4)         # two live f32 activation slabs
    fit = max(128, (vmem_budget - (4 << 20)) // per_col)
    target = max(128, (4 << 20) // max(1, in_dim * x_itemsize))
    tile_m = max(128, (min(fit, target) // 128) * 128)
    if batch <= tile_m:
        if batch >= 1024:
            # Keep >= 2 grid steps so both v7x TensorCores get work.
            return _round_up(-(-batch // 2), 128)
        return batch                        # single full block (== array dim)
    return tile_m


def simple_ann_forward(x, params, activation, *, tile_m=None,
                       matmul_dtype=jnp.bfloat16):
    """Fused SimpleANN forward pass as a single batch-tiled pallas_call.

    x:      (batch, input_dim)
    params: list of (W, b) with W: (in, out), b: (1, out), float32
    Returns (batch, 1) float32.
    """
    num_linears = len(params)
    batch, in_dim = x.shape
    out_dim = params[-1][0].shape[1]

    prepared, final_as_reduce = prepare_params(params, matmul_dtype)
    max_width = max(w.shape[0] for w, _ in prepared)

    # Single layout pass: transpose to (in_dim, batch) with the bf16 cast fused
    # in (x is down-cast at the first dot anyway, so numerics are unchanged).
    x_t = x.T.astype(matmul_dtype)

    vmem_budget = _vmem_budget_bytes()
    if tile_m is None:
        tm = _choose_tile_m(batch, in_dim, max_width, x_t.dtype.itemsize,
                            vmem_budget)
    else:
        tm = int(tile_m)
        tm = batch if tm >= batch else max(128, _round_up(tm, 128))
    grid = (pl.cdiv(batch, tm),)

    const_map = lambda i: (0, 0)
    col_map = lambda i: (0, i)

    flat_params = []
    for w, b in prepared:
        flat_params += [w, b]

    out_specs = pl.BlockSpec((out_dim, tm), col_map)
    out_shape = jax.ShapeDtypeStruct((out_dim, batch), jnp.float32)

    # Advisory cost estimate + explicit VMEM limit.
    flops = 2 * batch * sum(w.shape[0] * w.shape[1] for w, _ in params)
    transcendentals = 0
    if activation in ("sigmoid", "tanh"):
        transcendentals = batch * sum(w.shape[1] for w, _ in params[:-1])
    param_bytes = sum(int(a.size) * a.dtype.itemsize for a in flat_params)
    bytes_accessed = int(x_t.size * x_t.dtype.itemsize + param_bytes
                         + batch * out_dim * 4)
    per_step_vmem = (2 * in_dim * tm * x_t.dtype.itemsize
                     + 2 * out_dim * tm * 4
                     + 2 * max_width * tm * 4
                     + 2 * param_bytes)
    vmem_limit = int(min(vmem_budget, max(16 << 20, per_step_vmem + (4 << 20))))

    kernel = make_mlp_kernel(num_linears, activation, final_as_reduce,
                             matmul_dtype)

    def run(single_buffer_weights):
        kw = ({"pipeline_mode": pl.Buffered(1)}
              if single_buffer_weights else {})
        in_specs = [pl.BlockSpec((in_dim, tm), col_map)]
        for w, b in prepared:
            # Block index never changes -> VMEM-resident weights/biases.
            in_specs.append(pl.BlockSpec(w.shape, const_map, **kw))
            in_specs.append(pl.BlockSpec(b.shape, const_map, **kw))
        return pl.pallas_call(
            kernel,
            grid=grid,
            in_specs=in_specs,
            out_specs=out_specs,
            out_shape=out_shape,
            compiler_params=pltpu.CompilerParams(
                dimension_semantics=("parallel",),
                vmem_limit_bytes=vmem_limit,
            ),
            cost_estimate=pl.CostEstimate(
                flops=int(flops),
                transcendentals=int(transcendentals),
                bytes_accessed=bytes_accessed,
            ),
        )(x_t, *flat_params)

    try:
        out = run(single_buffer_weights=True)
    except Exception:
        # Fallback if this JAX/Mosaic build rejects Buffered(1) specs.
        out = run(single_buffer_weights=False)

    return out.T  # (1, batch) -> (batch, 1)


def init_simple_ann_params(key, input_dim, hidden_layers, nodes):
    """Deterministic PyTorch-style init: U(-1/sqrt(fan_in), 1/sqrt(fan_in))."""
    dims = [input_dim] + [nodes] * hidden_layers + [1]
    params = []
    for fan_in, fan_out in zip(dims[:-1], dims[1:]):
        key, kw, kb = jax.random.split(key, 3)
        bound = 1.0 / math.sqrt(fan_in)
        w = jax.random.uniform(kw, (fan_in, fan_out), jnp.float32,
                               minval=-bound, maxval=bound)
        b = jax.random.uniform(kb, (1, fan_out), jnp.float32,
                               minval=-bound, maxval=bound)
        params.append((w, b))
    return params


def reference_forward(x, params, activation):
    """Plain f32 reference matching the PyTorch module."""
    act = ACTS[activation]
    h = x
    for i, (w, b) in enumerate(params):
        h = h @ w + b
        if i < len(params) - 1:
            h = act(h)
    return h


def matching_reference(x, params, activation, matmul_dtype=jnp.bfloat16):
    """Reference using the kernel's exact precision recipe (bf16 MXU inputs,
    f32 accumulation, f32 bias/act, f32 sublane-reduce final layer)."""
    prepared, final_as_reduce = prepare_params(params, matmul_dtype)
    act = ACTS[activation]
    h = x.T.astype(matmul_dtype)
    last = len(prepared) - 1
    for i, (w, b) in enumerate(prepared):
        if i == last and final_as_reduce:
            h = jnp.sum(h.astype(jnp.float32) * w, axis=0, keepdims=True) + b
        else:
            h = jnp.dot(w, h.astype(matmul_dtype),
                        preferred_element_type=jnp.float32) + b
            if i < last:
                h = act(h)
    return h.T


if __name__ == "__main__":
    # SimpleANN(input_dim=16, hidden_layers=2, nodes=32, activation='relu')
    input_dim, hidden_layers, nodes, activation = 16, 2, 32, "relu"

    key = jax.random.PRNGKey(0)
    key, kx = jax.random.split(key)
    params = init_simple_ann_params(key, input_dim, hidden_layers, nodes)

    # Small run (shapes consistent with the module): auto tile, grid=1.
    batch = 8
    x = jax.random.normal(kx, (batch, input_dim), jnp.float32)
    out = jax.block_until_ready(simple_ann_forward(x, params, activation))
    assert out.shape == (batch, 1), out.shape
    ref_exact = matching_reference(x, params, activation)
    ref_f32 = reference_forward(x, params, activation)
    assert jnp.allclose(out, ref_exact, atol=1e-4, rtol=1e-4), (
        float(jnp.max(jnp.abs(out - ref_exact))))
    assert jnp.allclose(out, ref_f32, atol=2e-2, rtol=2e-2), (
        float(jnp.max(jnp.abs(out - ref_f32))))

    # Non-multiple batch with explicit tile: exercises grid=2 with a partial
    # (masked) tail block and no wrapper-side padding.
    key, kx2 = jax.random.split(key)
    batch2 = 200
    x2 = jax.random.normal(kx2, (batch2, input_dim), jnp.float32)
    out2 = jax.block_until_ready(
        simple_ann_forward(x2, params, activation, tile_m=128))
    assert out2.shape == (batch2, 1), out2.shape
    assert jnp.allclose(out2, matching_reference(x2, params, activation),
                        atol=1e-4, rtol=1e-4)
    assert jnp.allclose(out2, reference_forward(x2, params, activation),
                        atol=2e-2, rtol=2e-2)

    # Transcendental activation path (tanh on EUP, f32).
    out3 = jax.block_until_ready(simple_ann_forward(x, params, "tanh"))
    assert jnp.allclose(out3, matching_reference(x, params, "tanh"),
                        atol=1e-4, rtol=1e-4)
    assert jnp.allclose(out3, reference_forward(x, params, "tanh"),
                        atol=2e-2, rtol=2e-2)

    print("KERNEL_OK")
</pallas_src>

<mosaic_0001>
module attributes {stable_mosaic.version = 11 : i64} {
  func.func @kernel(%arg0: i32, %arg1: memref<16x8xbf16, #tpu.memory_space<vmem>>, %arg2: memref<32x16xbf16, #tpu.memory_space<vmem>>, %arg3: memref<32x1xf32, #tpu.memory_space<vmem>>, %arg4: memref<32x32xbf16, #tpu.memory_space<vmem>>, %arg5: memref<32x1xf32, #tpu.memory_space<vmem>>, %arg6: memref<32x1xf32, #tpu.memory_space<vmem>>, %arg7: memref<1x1xf32, #tpu.memory_space<vmem>>, %arg8: memref<1x8xf32, #tpu.memory_space<vmem>>) attributes {dimension_semantics = [#tpu.dimension_semantics<parallel>], iteration_bounds = array<i64: 1>, scalar_prefetch = 0 : i64, scratch_operands = 0 : i64, tpu.core_type = #tpu.core_type<tc>, window_params = [{transform_indices = @transform_0, window_bounds = array<i64: 16, 8>}, {pipeline_mode = #tpu.pipeline_mode<synchronous>, transform_indices = @transform_1, window_bounds = array<i64: 32, 16>}, {pipeline_mode = #tpu.pipeline_mode<synchronous>, transform_indices = @transform_2, window_bounds = array<i64: 32, 1>}, {pipeline_mode = #tpu.pipeline_mode<synchronous>, transform_indices = @transform_3, window_bounds = array<i64: 32, 32>}, {pipeline_mode = #tpu.pipeline_mode<synchronous>, transform_indices = @transform_4, window_bounds = array<i64: 32, 1>}, {pipeline_mode = #tpu.pipeline_mode<synchronous>, transform_indices = @transform_5, window_bounds = array<i64: 32, 1>}, {pipeline_mode = #tpu.pipeline_mode<synchronous>, transform_indices = @transform_6, window_bounds = array<i64: 1, 1>}, {transform_indices = @transform_7, window_bounds = array<i64: 1, 8>}]} {
    %c0 = arith.constant 0 : index
    %c0_0 = arith.constant 0 : index
    %0 = vector.load %arg1[%c0, %c0_0] : memref<16x8xbf16, #tpu.memory_space<vmem>>, vector<16x8xbf16>
    %c0_1 = arith.constant 0 : index
    %c0_2 = arith.constant 0 : index
    %1 = vector.load %arg2[%c0_1, %c0_2] : memref<32x16xbf16, #tpu.memory_space<vmem>>, vector<32x16xbf16>
    %c0_3 = arith.constant 0 : index
    %c0_4 = arith.constant 0 : index
    %2 = vector.load %arg3[%c0_3, %c0_4] : memref<32x1xf32, #tpu.memory_space<vmem>>, vector<32x1xf32>
    %cst = arith.constant dense<0.000000e+00> : vector<32x8xf32>
    %3 = tpu.matmul %1, %0, %cst {dimension_numbers = #tpu.dot_dimension_numbers<[1], [0], [0], [1], [0, 0, 1, 1], [], []>} : vector<32x16xbf16>, vector<16x8xbf16>, vector<32x8xf32> -> vector<32x8xf32>
    %4 = vector.broadcast %2 : vector<32x1xf32> to vector<32x8xf32>
    %5 = arith.addf %3, %4 : vector<32x8xf32>
    %cst_5 = arith.constant 0.000000e+00 : f32
    %6 = vector.broadcast %cst_5 : f32 to vector<32x8xf32>
    %7 = arith.maximumf %5, %6 : vector<32x8xf32>
    %c0_6 = arith.constant 0 : index
    %c0_7 = arith.constant 0 : index
    %8 = vector.load %arg4[%c0_6, %c0_7] : memref<32x32xbf16, #tpu.memory_space<vmem>>, vector<32x32xbf16>
    %c0_8 = arith.constant 0 : index
    %c0_9 = arith.constant 0 : index
    %9 = vector.load %arg5[%c0_8, %c0_9] : memref<32x1xf32, #tpu.memory_space<vmem>>, vector<32x1xf32>
    %10 = arith.truncf %7 : vector<32x8xf32> to vector<32x8xbf16>
    %cst_10 = arith.constant dense<0.000000e+00> : vector<32x8xf32>
    %11 = tpu.matmul %8, %10, %cst_10 {dimension_numbers = #tpu.dot_dimension_numbers<[1], [0], [0], [1], [0, 0, 1, 1], [], []>} : vector<32x32xbf16>, vector<32x8xbf16>, vector<32x8xf32> -> vector<32x8xf32>
    %12 = vector.broadcast %9 : vector<32x1xf32> to vector<32x8xf32>
    %13 = arith.addf %11, %12 : vector<32x8xf32>
    %cst_11 = arith.constant 0.000000e+00 : f32
    %14 = vector.broadcast %cst_11 : f32 to vector<32x8xf32>
    %15 = arith.maximumf %13, %14 : vector<32x8xf32>
    %c0_12 = arith.constant 0 : index
    %c0_13 = arith.constant 0 : index
    %16 = vector.load %arg6[%c0_12, %c0_13] : memref<32x1xf32, #tpu.memory_space<vmem>>, vector<32x1xf32>
    %c0_14 = arith.constant 0 : index
    %c0_15 = arith.constant 0 : index
    %17 = vector.load %arg7[%c0_14, %c0_15] : memref<1x1xf32, #tpu.memory_space<vmem>>, vector<1x1xf32>
    %18 = vector.broadcast %16 : vector<32x1xf32> to vector<32x8xf32>
    %19 = arith.mulf %15, %18 : vector<32x8xf32>
    %cst_16 = arith.constant dense<0.000000e+00> : vector<8xf32>
    %20 = vector.multi_reduction <add>, %19, %cst_16 [0] : vector<32x8xf32> to vector<8xf32>
    %21 = vector.shape_cast %20 : vector<8xf32> to vector<1x8xf32>
    %22 = vector.broadcast %17 : vector<1x1xf32> to vector<1x8xf32>
    %23 = arith.addf %21, %22 : vector<1x8xf32>
    %c0_17 = arith.constant 0 : index
    %c0_18 = arith.constant 0 : index
    %24 = vector.load %arg8[%c0_17, %c0_18] : memref<1x8xf32, #tpu.memory_space<vmem>>, vector<1x8xf32>
    tpu.vector_store %arg8[%c0_17, %c0_18], %23 {strides = array<i32>} : memref<1x8xf32, #tpu.memory_space<vmem>>, vector<1x8xf32>,
    return
  }
  func.func @transform_0(%arg0: i32) -> (i32, i32) {
    %c0_i32 = arith.constant 0 : i32
    %c0_i32_0 = arith.constant 0 : i32
    return %c0_i32, %arg0 : i32, i32
  }
  func.func @transform_1(%arg0: i32) -> (i32, i32) {
    %c0_i32 = arith.constant 0 : i32
    %c0_i32_0 = arith.constant 0 : i32
    %c0_i32_1 = arith.constant 0 : i32
    return %c0_i32, %c0_i32_0 : i32, i32
  }
  func.func @transform_2(%arg0: i32) -> (i32, i32) {
    %c0_i32 = arith.constant 0 : i32
    %c0_i32_0 = arith.constant 0 : i32
    %c0_i32_1 = arith.constant 0 : i32
    return %c0_i32, %c0_i32_0 : i32, i32
  }
  func.func @transform_3(%arg0: i32) -> (i32, i32) {
    %c0_i32 = arith.constant 0 : i32
    %c0_i32_0 = arith.constant 0 : i32
    %c0_i32_1 = arith.constant 0 : i32
    return %c0_i32, %c0_i32_0 : i32, i32
  }
  func.func @transform_4(%arg0: i32) -> (i32, i32) {
    %c0_i32 = arith.constant 0 : i32
    %c0_i32_0 = arith.constant 0 : i32
    %c0_i32_1 = arith.constant 0 : i32
    return %c0_i32, %c0_i32_0 : i32, i32
  }
  func.func @transform_5(%arg0: i32) -> (i32, i32) {
    %c0_i32 = arith.constant 0 : i32
    %c0_i32_0 = arith.constant 0 : i32
    %c0_i32_1 = arith.constant 0 : i32
    return %c0_i32, %c0_i32_0 : i32, i32
  }
  func.func @transform_6(%arg0: i32) -> (i32, i32) {
    %c0_i32 = arith.constant 0 : i32
    %c0_i32_0 = arith.constant 0 : i32
    %c0_i32_1 = arith.constant 0 : i32
    return %c0_i32, %c0_i32_0 : i32, i32
  }
  func.func @transform_7(%arg0: i32) -> (i32, i32) {
    %c0_i32 = arith.constant 0 : i32
    %c0_i32_0 = arith.constant 0 : i32
    return %c0_i32, %arg0 : i32, i32
  }
}

module attributes {stable_mosaic.version = 11 : i64} {
  func.func @kernel(%arg0: i32, %arg1: memref<16x8xbf16, #tpu.memory_space<vmem>>, %arg2: memref<32x16xbf16, #tpu.memory_space<vmem>>, %arg3: memref<32x1xf32, #tpu.memory_space<vmem>>, %arg4: memref<32x32xbf16, #tpu.memory_space<vmem>>, %arg5: memref<32x1xf32, #tpu.memory_space<vmem>>, %arg6: memref<32x1xf32, #tpu.memory_space<vmem>>, %arg7: memref<1x1xf32, #tpu.memory_space<vmem>>, %arg8: memref<1x8xf32, #tpu.memory_space<vmem>>) attributes {dimension_semantics = [#tpu.dimension_semantics<parallel>], iteration_bounds = array<i64: 1>, scalar_prefetch = 0 : i64, scratch_operands = 0 : i64, tpu.core_type = #tpu.core_type<tc>, window_params = [{transform_indices = @transform_0, window_bounds = array<i64: 16, 8>}, {pipeline_mode = #tpu.pipeline_mode<synchronous>, transform_indices = @transform_1, window_bounds = array<i64: 32, 16>}, {pipeline_mode = #tpu.pipeline_mode<synchronous>, transform_indices = @transform_2, window_bounds = array<i64: 32, 1>}, {pipeline_mode = #tpu.pipeline_mode<synchronous>, transform_indices = @transform_3, window_bounds = array<i64: 32, 32>}, {pipeline_mode = #tpu.pipeline_mode<synchronous>, transform_indices = @transform_4, window_bounds = array<i64: 32, 1>}, {pipeline_mode = #tpu.pipeline_mode<synchronous>, transform_indices = @transform_5, window_bounds = array<i64: 32, 1>}, {pipeline_mode = #tpu.pipeline_mode<synchronous>, transform_indices = @transform_6, window_bounds = array<i64: 1, 1>}, {transform_indices = @transform_7, window_bounds = array<i64: 1, 8>}]} {
    %c0 = arith.constant 0 : index
    %c0_0 = arith.constant 0 : index
    %0 = vector.load %arg1[%c0, %c0_0] : memref<16x8xbf16, #tpu.memory_space<vmem>>, vector<16x8xbf16>
    %c0_1 = arith.constant 0 : index
    %c0_2 = arith.constant 0 : index
    %1 = vector.load %arg2[%c0_1, %c0_2] : memref<32x16xbf16, #tpu.memory_space<vmem>>, vector<32x16xbf16>
    %c0_3 = arith.constant 0 : index
    %c0_4 = arith.constant 0 : index
    %2 = vector.load %arg3[%c0_3, %c0_4] : memref<32x1xf32, #tpu.memory_space<vmem>>, vector<32x1xf32>
    %cst = arith.constant dense<0.000000e+00> : vector<32x8xf32>
    %3 = tpu.matmul %1, %0, %cst {dimension_numbers = #tpu.dot_dimension_numbers<[1], [0], [0], [1], [0, 0, 1, 1], [], []>} : vector<32x16xbf16>, vector<16x8xbf16>, vector<32x8xf32> -> vector<32x8xf32>
    %4 = vector.broadcast %2 : vector<32x1xf32> to vector<32x8xf32>
    %5 = arith.addf %3, %4 : vector<32x8xf32>
    %cst_5 = arith.constant 0.000000e+00 : f32
    %6 = vector.broadcast %cst_5 : f32 to vector<32x8xf32>
    %7 = arith.maximumf %5, %6 : vector<32x8xf32>
    %c0_6 = arith.constant 0 : index
    %c0_7 = arith.constant 0 : index
    %8 = vector.load %arg4[%c0_6, %c0_7] : memref<32x32xbf16, #tpu.memory_space<vmem>>, vector<32x32xbf16>
    %c0_8 = arith.constant 0 : index
    %c0_9 = arith.constant 0 : index
    %9 = vector.load %arg5[%c0_8, %c0_9] : memref<32x1xf32, #tpu.memory_space<vmem>>, vector<32x1xf32>
    %10 = arith.truncf %7 : vector<32x8xf32> to vector<32x8xbf16>
    %cst_10 = arith.constant dense<0.000000e+00> : vector<32x8xf32>
    %11 = tpu.matmul %8, %10, %cst_10 {dimension_numbers = #tpu.dot_dimension_numbers<[1], [0], [0], [1], [0, 0, 1, 1], [], []>} : vector<32x32xbf16>, vector<32x8xbf16>, vector<32x8xf32> -> vector<32x8xf32>
    %12 = vector.broadcast %9 : vector<32x1xf32> to vector<32x8xf32>
    %13 = arith.addf %11, %12 : vector<32x8xf32>
    %cst_11 = arith.constant 0.000000e+00 : f32
    %14 = vector.broadcast %cst_11 : f32 to vector<32x8xf32>
    %15 = arith.maximumf %13, %14 : vector<32x8xf32>
    %c0_12 = arith.constant 0 : index
    %c0_13 = arith.constant 0 : index
    %16 = vector.load %arg6[%c0_12, %c0_13] : memref<32x1xf32, #tpu.memory_space<vmem>>, vector<32x1xf32>
    %c0_14 = arith.constant 0 : index
    %c0_15 = arith.constant 0 : index
    %17 = vector.load %arg7[%c0_14, %c0_15] : memref<1x1xf32, #tpu.memory_space<vmem>>, vector<1x1xf32>
    %18 = vector.broadcast %16 : vector<32x1xf32> to vector<32x8xf32>
    %19 = arith.mulf %15, %18 : vector<32x8xf32>
    %cst_16 = arith.constant dense<0.000000e+00> : vector<8xf32>
    %20 = vector.multi_reduction <add>, %19, %cst_16 [0] : vector<32x8xf32> to vector<8xf32>
    %21 = vector.shape_cast %20 : vector<8xf32> to vector<1x8xf32>
    %22 = vector.broadcast %17 : vector<1x1xf32> to vector<1x8xf32>
    %23 = arith.addf %21, %22 : vector<1x8xf32>
    %c0_17 = arith.constant 0 : index
    %c0_18 = arith.constant 0 : index
    %24 = vector.load %arg8[%c0_17, %c0_18] : memref<1x8xf32, #tpu.memory_space<vmem>>, vector<1x8xf32>
    tpu.vector_store %arg8[%c0_17, %c0_18], %23 {strides = array<i32>} : memref<1x8xf32, #tpu.memory_space<vmem>>, vector<1x8xf32>,
    return
  }
  func.func @transform_0(%arg0: i32) -> (i32, i32) {
    %c0_i32 = arith.constant 0 : i32
    %c0_i32_0 = arith.constant 0 : i32
    return %c0_i32, %arg0 : i32, i32
  }
  func.func @transform_1(%arg0: i32) -> (i32, i32) {
    %c0_i32 = arith.constant 0 : i32
    %c0_i32_0 = arith.constant 0 : i32
    %c0_i32_1 = arith.constant 0 : i32
    return %c0_i32, %c0_i32_0 : i32, i32
  }
  func.func @transform_2(%arg0: i32) -> (i32, i32) {
    %c0_i32 = arith.constant 0 : i32
    %c0_i32_0 = arith.constant 0 : i32
    %c0_i32_1 = arith.constant 0 : i32
    return %c0_i32, %c0_i32_0 : i32, i32
  }
  func.func @transform_3(%arg0: i32) -> (i32, i32) {
    %c0_i32 = arith.constant 0 : i32
    %c0_i32_0 = arith.constant 0 : i32
    %c0_i32_1 = arith.constant 0 : i32
    return %c0_i32, %c0_i32_0 : i32, i32
  }
  func.func @transform_4(%arg0: i32) -> (i32, i32) {
    %c0_i32 = arith.constant 0 : i32
    %c0_i32_0 = arith.constant 0 : i32
    %c0_i32_1 = arith.constant 0 : i32
    return %c0_i32, %c0_i32_0 : i32, i32
  }
  func.func @transform_5(%arg0: i32) -> (i32, i32) {
    %c0_i32 = arith.constant 0 : i32
    %c0_i32_0 = arith.constant 0 : i32
    %c0_i32_1 = arith.constant 0 : i32
    return %c0_i32, %c0_i32_0 : i32, i32
  }
  func.func @transform_6(%arg0: i32) -> (i32, i32) {
    %c0_i32 = arith.constant 0 : i32
    %c0_i32_0 = arith.constant 0 : i32
    %c0_i32_1 = arith.constant 0 : i32
    return %c0_i32, %c0_i32_0 : i32, i32
  }
  func.func @transform_7(%arg0: i32) -> (i32, i32) {
    %c0_i32 = arith.constant 0 : i32
    %c0_i32_0 = arith.constant 0 : i32
    return %c0_i32, %arg0 : i32, i32
  }
}

</mosaic_0001>

<llo_original>
// kernel: tpu_custom_call.1
$region0: #{tpu_custom_call.1}
  #allocation0 [shape = 'u32[]', space=smem, size = 0x4, offset = 0x4, fixed_abs, tag = 'smem constant byte address 0x4 - core index']
  #allocation1 [shape = 'u32[144,128]{1,0:T(1,128)}', space=vmem, size = 0x12000, scoped, tag = 'internal scratch']
  #allocation2 [shape = 'f32[1,1]{1,0:T(1,128)S(1)}', space=vmem, size = 0x200, scoped, tag = 'scoped memory for tpu_custom_call.1']
  %s0 = inlined_call_operand.vmem [shape: bf16[16,8], index: 0, kind: input, shape index: {}]
  %s1 = inlined_call_operand.vmem [shape: bf16[32,16], index: 1, kind: input, shape index: {}]
  %s2 = inlined_call_operand.vmem [shape: f32[32,1], index: 2, kind: input, shape index: {}]
  %s3 = inlined_call_operand.vmem [shape: bf16[32,32], index: 3, kind: input, shape index: {}]
  %s4 = inlined_call_operand.vmem [shape: f32[32,1], index: 4, kind: input, shape index: {}]
  %s5 = inlined_call_operand.vmem [shape: f32[32,1], index: 5, kind: input, shape index: {}]
  %s6 = inlined_call_operand.<no memory space> [shape: f32[1,1], index: 6, kind: input, shape index: {}]
  %s7 = inlined_call_operand.hbm [shape: f32[1,8], index: 7, kind: output, shape index: {}]
  %s8 = sld [smem:[#allocation0]]
  $region38: #{tpu_custom_call.1} parent=0
    _
  %s10 = ssub.s32 1, %s8
  %s11 = scalar_select 0, %s10, %s8
  %v12 = vstv %s6
  %13 = vst [vmem:[#allocation2] sm:$0x1] %v12
  $region1: #{tpu_custom_call.1} parent=0
    #allocation3 [shape = 'u8[512]{0}', space=vmem, size = 0x400, scoped, tag = 'output window, operand 0, single buffered']
    #allocation4 [shape = 's32[1]{0}', space=sflag, size = 0x4, scoped, tag = 'scoped memory for tpu_custom_call.1']
    %14 = vsyncpa [#allocation4], 0
    // Predicated region
    $region2: #{tpu_custom_call.1} parent=1 // pred_check
      _
    $region3: #{tpu_custom_call.1} parent=1 // pred_check_branch
      %16 = sbr.rel (0) target = $region5
    $region4: #{tpu_custom_call.1} parent=1 // pred_region
      _
    $region5: #{tpu_custom_call.1} parent=1 // pred_fallthru
      _
    // Predicated region
    $region6: #{tpu_custom_call.1} parent=1 // pred_check
      _
    $region7: #{tpu_custom_call.1} parent=1 // pred_check_branch
      %18 = sbr.rel (0) target = $region9
    $region8: #{tpu_custom_call.1} parent=1 // pred_region
      _
    $region9: #{tpu_custom_call.1} parent=1 // pred_fallthru
      _
    // Predicated region
    $region10: #{tpu_custom_call.1} parent=1 // pred_check
      _
    $region11: #{tpu_custom_call.1} parent=1 // pred_check_branch
      %20 = sbr.rel (0) target = $region13
    $region12: #{tpu_custom_call.1} parent=1 // pred_region
      _
    $region13: #{tpu_custom_call.1} parent=1 // pred_fallthru
      _
    // Predicated region
    $region14: #{tpu_custom_call.1} parent=1 // pred_check
      _
    $region15: #{tpu_custom_call.1} parent=1 // pred_check_branch
      %22 = sbr.rel (0) target = $region17
    $region16: #{tpu_custom_call.1} parent=1 // pred_region
      _
    $region17: #{tpu_custom_call.1} parent=1 // pred_fallthru
      _
    // Predicated region
    $region18: #{tpu_custom_call.1} parent=1 // pred_check
      _
    $region19: #{tpu_custom_call.1} parent=1 // pred_check_branch
      %24 = sbr.rel (0) target = $region21
    $region20: #{tpu_custom_call.1} parent=1 // pred_region
      _
    $region21: #{tpu_custom_call.1} parent=1 // pred_fallthru
      _
    // Predicated region
    $region22: #{tpu_custom_call.1} parent=1 // pred_check
      _
    $region23: #{tpu_custom_call.1} parent=1 // pred_check_branch
      %26 = sbr.rel (0) target = $region25
    $region24: #{tpu_custom_call.1} parent=1 // pred_region
      _
    $region25: #{tpu_custom_call.1} parent=1 // pred_fallthru
      _
    // Predicated region
    $region26: #{tpu_custom_call.1} parent=1 // pred_check
      _
    $region27: #{tpu_custom_call.1} parent=1 // pred_check_branch
      %28 = sbr.rel (0) target = $region29
    $region28: #{tpu_custom_call.1} parent=1 // pred_region
      _
    $region29: #{tpu_custom_call.1} parent=1 // pred_fallthru
      _
    %v30 = vld [vmem:[%s0] sm:$0xf]
    %v31 = vld [vmem:[%s0 + $0x4] sm:$0xf]
    %v32 = vld [vmem:[%s1] sm:$0xf]
    %v33 = vld [vmem:[%s1 + $0x4] sm:$0xf]
    %v34 = vld [vmem:[%s1 + $0x8] sm:$0xf]
    %v35 = vld [vmem:[%s1 + $0xc] sm:$0xf]
    %v36 = vld [vmem:[%s2] sm:$0xff]
    %v37 = vld [vmem:[%s2 + $0x8] sm:$0xff]
    %v38 = vld [vmem:[%s2 + $0x10] sm:$0xff]
    %v39 = vld [vmem:[%s2 + $0x18] sm:$0xff]
    %41 = vset.pattern.permute.xlu0 0
    %42 = vperm.xlu0 %41, %v36
    %v43 = vpop.permute.xlu0 %42
    %46 = vset.pattern.permute.xlu0 0
    %47 = vperm.xlu0 %46, %v37
    %v48 = vpop.permute.xlu0 %47
    %51 = vset.pattern.permute.xlu0 0
    %52 = vperm.xlu0 %51, %v38
    %v53 = vpop.permute.xlu0 %52
    %56 = vset.pattern.permute.xlu0 0
    %57 = vperm.xlu0 %56, %v39
    %v58 = vpop.permute.xlu0 %57
    %v64 = vunpack.c.l.b16 %v32
    %v65 = vunpack.c.l.b16 %v33
    %v66 = vunpack.c.l.b16 %v34
    %v67 = vunpack.c.l.b16 %v35
    %v68 = vpack.c.b16 %v65, %v64
    %v69 = vpack.c.b16 %v67, %v66
    %v72 = vunpack.c.l.b16 %v30
    %v73 = vunpack.c.l.b16 %v31
    %v74 = vpack.c.b16 %v73, %v72
    %vm76 = vcmask 130048
    %v78 = vsel %vm76, %v68, 0
    %v81 = vsel %vm76, %v69, 0
    %83 = vmatprep.subr.bf16.mxu0 0
    %84 = vmatpush1.bf16.msra.mxu0 %v74
    %85 = vmatprep.subr.bf16.mxu0 0
    %86 = vmatpush1.bf16.msra.mxu0 0
    %87 = vmatprep.subr.bf16.mxu0 0
    %88 = vmatpush1.bf16.msra.mxu0 0
    %89 = vmatprep.subr.bf16.mxu0 0
    %90 = vmatpush1.bf16.msra.mxu0 0
    %91 = vmatprep.subr.bf16.mxu0 0
    %92 = vmatpush1.bf16.msra.mxu0 0
    %93 = vmatprep.subr.bf16.mxu0 0
    %94 = vmatpush1.bf16.msra.mxu0 0
    %95 = vmatprep.subr.bf16.mxu0 0
    %96 = vmatpush1.bf16.msra.mxu0 0
    %97 = vmatprep.subr.bf16.mxu0 0
    %98 = vmatpush1.bf16.msra.mxu0 0
    %99 = vmatprep.subr.bf16.mxu0 0
    %100 = vmatpush1.bf16.msra.mxu0 0
    %101 = vmatprep.subr.bf16.mxu0 0
    %102 = vmatpush1.bf16.msra.mxu0 0
    %103 = vmatprep.subr.bf16.mxu0 0
    %104 = vmatpush1.bf16.msra.mxu0 0
    %105 = vmatprep.subr.bf16.mxu0 0
    %106 = vmatpush1.bf16.msra.mxu0 0
    %107 = vmatprep.subr.bf16.mxu0 0
    %108 = vmatpush1.bf16.msra.mxu0 0
    %109 = vmatprep.subr.bf16.mxu0 0
    %110 = vmatpush1.bf16.msra.mxu0 0
    %111 = vmatprep.subr.bf16.mxu0 0
    %112 = vmatpush1.bf16.msra.mxu0 0
    %113 = vmatprep.subr.bf16.mxu0 0
    %114 = vmatpush1.bf16.msra.mxu0 0
    %115 = vmatprep.mubr.bf16.mxu0 0
    %116 = vmatmul.mubr.bf16.gmra.mrb[0].mxu0 %v78
    %v117 = vpop.f32.mrb[0].mxu0
    %v118 = vadd.f32 %v43, %v117
    %v119 = vpop.f32.mrb[0].mxu0
    %v120 = vpop.f32.mrb[0].mxu0
    %v121 = vadd.f32 %v48, %v120
    %v122 = vpop.f32.mrb[0].mxu0
    %123 = vmatprep.mubr.bf16.mxu0 0
    %124 = vmatmul.mubr.bf16.gmra.mrb[0].mxu0 %v81
    %v125 = vpop.f32.mrb[0].mxu0
    %v126 = vadd.f32 %v53, %v125
    %v127 = vpop.f32.mrb[0].mxu0
    %v128 = vpop.f32.mrb[0].mxu0
    %v129 = vadd.f32 %v58, %v128
    %v130 = vpop.f32.mrb[0].mxu0
    %131 = vdwg.mxu0
    %v132 = vmax.f32 %v118, 0.0
    %v133 = vmax.f32 %v121, 0.0
    %v134 = vmax.f32 %v126, 0.0
    %v135 = vmax.f32 %v129, 0.0
    %v136 = vld [vmem:[%s3] sm:$0xf]
    %v137 = vld [vmem:[%s3 + $0x4] sm:$0xf]
    %v138 = vld [vmem:[%s3 + $0x8] sm:$0xf]
    %v139 = vld [vmem:[%s3 + $0xc] sm:$0xf]
    %v140 = vld [vmem:[%s4] sm:$0xff]
    %v141 = vld [vmem:[%s4 + $0x8] sm:$0xff]
    %v142 = vld [vmem:[%s4 + $0x10] sm:$0xff]
    %v143 = vld [vmem:[%s4 + $0x18] sm:$0xff]
    %v144 = vpack.c.bf16 %v133, %v132
    %v145 = vpack.c.bf16 %v135, %v134
    %147 = vset.pattern.permute.xlu0 0
    %148 = vperm.xlu0 %147, %v140
    %v149 = vpop.permute.xlu0 %148
    %152 = vset.pattern.permute.xlu0 0
    %153 = vperm.xlu0 %152, %v141
    %v154 = vpop.permute.xlu0 %153
    %157 = vset.pattern.permute.xlu0 0
    %158 = vperm.xlu0 %157, %v142
    %v159 = vpop.permute.xlu0 %158
    %162 = vset.pattern.permute.xlu0 0
    %163 = vperm.xlu0 %162, %v143
    %v164 = vpop.permute.xlu0 %163
    %v170 = vunpack.c.l.b16 %v136
    %v171 = vunpack.c.l.b16 %v137
    %v172 = vunpack.c.l.b16 %v138
    %v173 = vunpack.c.l.b16 %v139
    %v174 = vpack.c.b16 %v171, %v170
    %v175 = vpack.c.b16 %v173, %v172
    %vm176 = vcmask 261120
    %v178 = vsel %vm176, %v174, 0
    %v181 = vsel %vm176, %v175, 0
    %183 = vmatprep.subr.bf16.mxu0 0
    %184 = vmatpush1.bf16.msra.mxu0 %v144
    %185 = vmatprep.subr.bf16.mxu0 0
    %186 = vmatpush1.bf16.msra.mxu0 %v145
    %187 = vmatprep.subr.bf16.mxu0 0
    %188 = vmatpush1.bf16.msra.mxu0 0
    %189 = vmatprep.subr.bf16.mxu0 0
    %190 = vmatpush1.bf16.msra.mxu0 0
    %191 = vmatprep.subr.bf16.mxu0 0
    %192 = vmatpush1.bf16.msra.mxu0 0
    %193 = vmatprep.subr.bf16.mxu0 0
    %194 = vmatpush1.bf16.msra.mxu0 0
    %195 = vmatprep.subr.bf16.mxu0 0
    %196 = vmatpush1.bf16.msra.mxu0 0
    %197 = vmatprep.subr.bf16.mxu0 0
    %198 = vmatpush1.bf16.msra.mxu0 0
    %199 = vmatprep.subr.bf16.mxu0 0
    %200 = vmatpush1.bf16.msra.mxu0 0
    %201 = vmatprep.subr.bf16.mxu0 0
    %202 = vmatpush1.bf16.msra.mxu0 0
    %203 = vmatprep.subr.bf16.mxu0 0
    %204 = vmatpush1.bf16.msra.mxu0 0
    %205 = vmatprep.subr.bf16.mxu0 0
    %206 = vmatpush1.bf16.msra.mxu0 0
    %207 = vmatprep.subr.bf16.mxu0 0
    %208 = vmatpush1.bf16.msra.mxu0 0
    %209 = vmatprep.subr.bf16.mxu0 0
    %210 = vmatpush1.bf16.msra.mxu0 0
    %211 = vmatprep.subr.bf16.mxu0 0
    %212 = vmatpush1.bf16.msra.mxu0 0
    %213 = vmatprep.subr.bf16.mxu0 0
    %214 = vmatpush1.bf16.msra.mxu0 0
    %215 = vmatprep.mubr.bf16.mxu0 0
    %216 = vmatmul.mubr.bf16.gmra.mrb[0].mxu0 %v178
    %v217 = vpop.f32.mrb[0].mxu0
    %v218 = vadd.f32 %v149, %v217
    %v219 = vpop.f32.mrb[0].mxu0
    %v220 = vpop.f32.mrb[0].mxu0
    %v221 = vadd.f32 %v154, %v220
    %v222 = vpop.f32.mrb[0].mxu0
    %223 = vmatprep.mubr.bf16.mxu0 0
    %224 = vmatmul.mubr.bf16.gmra.mrb[0].mxu0 %v181
    %v225 = vpop.f32.mrb[0].mxu0
    %v226 = vadd.f32 %v159, %v225
    %v227 = vpop.f32.mrb[0].mxu0
    %v228 = vpop.f32.mrb[0].mxu0
    %v229 = vadd.f32 %v164, %v228
    %v230 = vpop.f32.mrb[0].mxu0
    %231 = vdwg.mxu0
    %v232 = vmax.f32 %v218, 0.0
    %v233 = vmax.f32 %v221, 0.0
    %v234 = vmax.f32 %v226, 0.0
    %v235 = vmax.f32 %v229, 0.0
    %v236 = vld [vmem:[%s5] sm:$0xff]
    %v237 = vld [vmem:[%s5 + $0x8] sm:$0xff]
    %v238 = vld [vmem:[%s5 + $0x10] sm:$0xff]
    %v239 = vld [vmem:[%s5 + $0x18] sm:$0xff]
    %v240 = vld [vmem:[#allocation2] sm:$0x1]
    %242 = vset.pattern.permute.xlu0 0
    %243 = vperm.xlu0 %242, %v236
    %v244 = vpop.permute.xlu0 %243
    %247 = vset.pattern.permute.xlu0 0
    %248 = vperm.xlu0 %247, %v237
    %v249 = vpop.permute.xlu0 %248
    %252 = vset.pattern.permute.xlu0 0
    %253 = vperm.xlu0 %252, %v238
    %v254 = vpop.permute.xlu0 %253
    %257 = vset.pattern.permute.xlu0 0
    %258 = vperm.xlu0 %257, %v239
    %v259 = vpop.permute.xlu0 %258
    %v261 = vmul.f32 %v232, %v244
    %v262 = vmul.f32 %v233, %v249
    %v263 = vmul.f32 %v234, %v254
    %v264 = vmul.f32 %v235, %v259
    %vm265 = vcmask 64512
    %v266 = vsel %vm265, %v261, 0.0
    %v267 = vsel %vm265, %v262, 0.0
    %v268 = vadd.f32 %v266, %v267
    %v269 = vsel %vm265, %v263, 0.0
    %v270 = vadd.f32 %v268, %v269
    %v271 = vsel %vm265, %v264, 0.0
    %v272 = vadd.f32 %v270, %v271
    %v273 = vrot.slane %v272, 4
    %v274 = vadd.f32 %v272, %v273
    %v275 = vrot.slane %v274, 2
    %v276 = vadd.f32 %v274, %v275
    %v277 = vrot.slane %v276, 1
    %v278 = vadd.f32 %v276, %v277
    %280 = vset.pattern.permute.xlu0 0
    %281 = vperm.xlu0 %280, %v240
    %v282 = vpop.permute.xlu0 %281
    %v284 = vlaneseq
    %v285 = vshrl.u32 %v284, 7
    %v286 = vsub.s32 0, %v285
    %v287 = vrot.slane %v282, %v286
    %v288 = vadd.f32 %v278, %v287
    %vm289 = vcmask 57344
    %290 = vst.msk [vmem:[#allocation3] sm:$0x1] %vm289, %v288
    // Predicated region
    $region30: #{tpu_custom_call.1} parent=1 // pred_check
      _
    $region31: #{tpu_custom_call.1} parent=1 // pred_check_branch
      %292 = sbr.rel (0) target = $region33
    $region32: #{tpu_custom_call.1} parent=1 // pred_region
      %s294 = ssub.s32 16, 16
      %295 = vsyncadd [#allocation4], %s294
      %s297 = sshll.u32 [#allocation3], 4
      %s298 = int_to_ptr.vmem [resolvable:$true] %s297
      %300 = dma.vmem_to_hbm [thread:$0]  %s298, 16, %s7, [#allocation4]
    $region33: #{tpu_custom_call.1} parent=1 // pred_fallthru
      _
    // Predicated region
    $region34: #{tpu_custom_call.1} parent=1 // pred_check
      _
    $region35: #{tpu_custom_call.1} parent=1 // pred_check_branch
      %302 = sbr.rel (0) target = $region37
    $region36: #{tpu_custom_call.1} parent=1 // pred_region
      %303 = dma.done [#allocation4], 16
    $region37: #{tpu_custom_call.1} parent=1 // pred_fallthru
      _
    %304 = vsyncpa [#allocation4], 1

// kernel: tpu_custom_call.1
$region0: #{tpu_custom_call.1}
  #allocation0 [shape = 'u32[]', space=smem, size = 0x4, offset = 0x4, fixed_abs, tag = 'smem constant byte address 0x4 - core index']
  #allocation1 [shape = 'u32[144,128]{1,0:T(1,128)}', space=vmem, size = 0x12000, scoped, tag = 'internal scratch']
  #allocation2 [shape = 'f32[1,1]{1,0:T(1,128)S(1)}', space=vmem, size = 0x200, scoped, tag = 'scoped memory for tpu_custom_call.1']
  %s0 = inlined_call_operand.vmem [shape: bf16[16,8], index: 0, kind: input, shape index: {}]
  %s1 = inlined_call_operand.vmem [shape: bf16[32,16], index: 1, kind: input, shape index: {}]
  %s2 = inlined_call_operand.vmem [shape: f32[32,1], index: 2, kind: input, shape index: {}]
  %s3 = inlined_call_operand.vmem [shape: bf16[32,32], index: 3, kind: input, shape index: {}]
  %s4 = inlined_call_operand.vmem [shape: f32[32,1], index: 4, kind: input, shape index: {}]
  %s5 = inlined_call_operand.vmem [shape: f32[32,1], index: 5, kind: input, shape index: {}]
  %s6 = inlined_call_operand.<no memory space> [shape: f32[1,1], index: 6, kind: input, shape index: {}]
  %s7 = inlined_call_operand.hbm [shape: f32[1,8], index: 7, kind: output, shape index: {}]
  %s8 = sld [smem:[#allocation0]]
  $region38: #{tpu_custom_call.1} parent=0
    _
  %s10 = ssub.s32 1, %s8
  %s11 = scalar_select 0, %s10, %s8
  %v12 = vstv %s6
  %13 = vst [vmem:[#allocation2] sm:$0x1] %v12
  $region1: #{tpu_custom_call.1} parent=0
    #allocation3 [shape = 'u8[512]{0}', space=vmem, size = 0x400, scoped, tag = 'output window, operand 0, single buffered']
    #allocation4 [shape = 's32[1]{0}', space=sflag, size = 0x4, scoped, tag = 'scoped memory for tpu_custom_call.1']
    %14 = vsyncpa [#allocation4], 0
    // Predicated region
    $region2: #{tpu_custom_call.1} parent=1 // pred_check
      _
    $region3: #{tpu_custom_call.1} parent=1 // pred_check_branch
      %16 = sbr.rel (0) target = $region5
    $region4: #{tpu_custom_call.1} parent=1 // pred_region
      _
    $region5: #{tpu_custom_call.1} parent=1 // pred_fallthru
      _
    // Predicated region
    $region6: #{tpu_custom_call.1} parent=1 // pred_check
      _
    $region7: #{tpu_custom_call.1} parent=1 // pred_check_branch
      %18 = sbr.rel (0) target = $region9
    $region8: #{tpu_custom_call.1} parent=1 // pred_region
      _
    $region9: #{tpu_custom_call.1} parent=1 // pred_fallthru
      _
    // Predicated region
    $region10: #{tpu_custom_call.1} parent=1 // pred_check
      _
    $region11: #{tpu_custom_call.1} parent=1 // pred_check_branch
      %20 = sbr.rel (0) target = $region13
    $region12: #{tpu_custom_call.1} parent=1 // pred_region
      _
    $region13: #{tpu_custom_call.1} parent=1 // pred_fallthru
      _
    // Predicated region
    $region14: #{tpu_custom_call.1} parent=1 // pred_check
      _
    $region15: #{tpu_custom_call.1} parent=1 // pred_check_branch
      %22 = sbr.rel (0) target = $region17
    $region16: #{tpu_custom_call.1} parent=1 // pred_region
      _
    $region17: #{tpu_custom_call.1} parent=1 // pred_fallthru
      _
    // Predicated region
    $region18: #{tpu_custom_call.1} parent=1 // pred_check
      _
    $region19: #{tpu_custom_call.1} parent=1 // pred_check_branch
      %24 = sbr.rel (0) target = $region21
    $region20: #{tpu_custom_call.1} parent=1 // pred_region
      _
    $region21: #{tpu_custom_call.1} parent=1 // pred_fallthru
      _
    // Predicated region
    $region22: #{tpu_custom_call.1} parent=1 // pred_check
      _
    $region23: #{tpu_custom_call.1} parent=1 // pred_check_branch
      %26 = sbr.rel (0) target = $region25
    $region24: #{tpu_custom_call.1} parent=1 // pred_region
      _
    $region25: #{tpu_custom_call.1} parent=1 // pred_fallthru
      _
    // Predicated region
    $region26: #{tpu_custom_call.1} parent=1 // pred_check
      _
    $region27: #{tpu_custom_call.1} parent=1 // pred_check_branch
      %28 = sbr.rel (0) target = $region29
    $region28: #{tpu_custom_call.1} parent=1 // pred_region
      _
    $region29: #{tpu_custom_call.1} parent=1 // pred_fallthru
      _
    %v30 = vld [vmem:[%s0] sm:$0xf]
    %v31 = vld [vmem:[%s0 + $0x4] sm:$0xf]
    %v32 = vld [vmem:[%s1] sm:$0xf]
    %v33 = vld [vmem:[%s1 + $0x4] sm:$0xf]
    %v34 = vld [vmem:[%s1 + $0x8] sm:$0xf]
    %v35 = vld [vmem:[%s1 + $0xc] sm:$0xf]
    %v36 = vld [vmem:[%s2] sm:$0xff]
    %v37 = vld [vmem:[%s2 + $0x8] sm:$0xff]
    %v38 = vld [vmem:[%s2 + $0x10] sm:$0xff]
    %v39 = vld [vmem:[%s2 + $0x18] sm:$0xff]
    %41 = vset.pattern.permute.xlu0 0
    %42 = vperm.xlu0 %41, %v36
    %v43 = vpop.permute.xlu0 %42
    %46 = vset.pattern.permute.xlu0 0
    %47 = vperm.xlu0 %46, %v37
    %v48 = vpop.permute.xlu0 %47
    %51 = vset.pattern.permute.xlu0 0
    %52 = vperm.xlu0 %51, %v38
    %v53 = vpop.permute.xlu0 %52
    %56 = vset.pattern.permute.xlu0 0
    %57 = vperm.xlu0 %56, %v39
    %v58 = vpop.permute.xlu0 %57
    %v64 = vunpack.c.l.b16 %v32
    %v65 = vunpack.c.l.b16 %v33
    %v66 = vunpack.c.l.b16 %v34
    %v67 = vunpack.c.l.b16 %v35
    %v68 = vpack.c.b16 %v65, %v64
    %v69 = vpack.c.b16 %v67, %v66
    %v72 = vunpack.c.l.b16 %v30
    %v73 = vunpack.c.l.b16 %v31
    %v74 = vpack.c.b16 %v73, %v72
    %vm76 = vcmask 130048
    %v78 = vsel %vm76, %v68, 0
    %v81 = vsel %vm76, %v69, 0
    %83 = vmatprep.subr.bf16.mxu0 0
    %84 = vmatpush1.bf16.msra.mxu0 %v74
    %85 = vmatprep.subr.bf16.mxu0 0
    %86 = vmatpush1.bf16.msra.mxu0 0
    %87 = vmatprep.subr.bf16.mxu0 0
    %88 = vmatpush1.bf16.msra.mxu0 0
    %89 = vmatprep.subr.bf16.mxu0 0
    %90 = vmatpush1.bf16.msra.mxu0 0
    %91 = vmatprep.subr.bf16.mxu0 0
    %92 = vmatpush1.bf16.msra.mxu0 0
    %93 = vmatprep.subr.bf16.mxu0 0
    %94 = vmatpush1.bf16.msra.mxu0 0
    %95 = vmatprep.subr.bf16.mxu0 0
    %96 = vmatpush1.bf16.msra.mxu0 0
    %97 = vmatprep.subr.bf16.mxu0 0
    %98 = vmatpush1.bf16.msra.mxu0 0
    %99 = vmatprep.subr.bf16.mxu0 0
    %100 = vmatpush1.bf16.msra.mxu0 0
    %101 = vmatprep.subr.bf16.mxu0 0
    %102 = vmatpush1.bf16.msra.mxu0 0
    %103 = vmatprep.subr.bf16.mxu0 0
    %104 = vmatpush1.bf16.msra.mxu0 0
    %105 = vmatprep.subr.bf16.mxu0 0
    %106 = vmatpush1.bf16.msra.mxu0 0
    %107 = vmatprep.subr.bf16.mxu0 0
    %108 = vmatpush1.bf16.msra.mxu0 0
    %109 = vmatprep.subr.bf16.mxu0 0
    %110 = vmatpush1.bf16.msra.mxu0 0
    %111 = vmatprep.subr.bf16.mxu0 0
    %112 = vmatpush1.bf16.msra.mxu0 0
    %113 = vmatprep.subr.bf16.mxu0 0
    %114 = vmatpush1.bf16.msra.mxu0 0
    %115 = vmatprep.mubr.bf16.mxu0 0
    %116 = vmatmul.mubr.bf16.gmra.mrb[0].mxu0 %v78
    %v117 = vpop.f32.mrb[0].mxu0
    %v118 = vadd.f32 %v43, %v117
    %v119 = vpop.f32.mrb[0].mxu0
    %v120 = vpop.f32.mrb[0].mxu0
    %v121 = vadd.f32 %v48, %v120
    %v122 = vpop.f32.mrb[0].mxu0
    %123 = vmatprep.mubr.bf16.mxu0 0
    %124 = vmatmul.mubr.bf16.gmra.mrb[0].mxu0 %v81
    %v125 = vpop.f32.mrb[0].mxu0
    %v126 = vadd.f32 %v53, %v125
    %v127 = vpop.f32.mrb[0].mxu0
    %v128 = vpop.f32.mrb[0].mxu0
    %v129 = vadd.f32 %v58, %v128
    %v130 = vpop.f32.mrb[0].mxu0
    %131 = vdwg.mxu0
    %v132 = vmax.f32 %v118, 0.0
    %v133 = vmax.f32 %v121, 0.0
    %v134 = vmax.f32 %v126, 0.0
    %v135 = vmax.f32 %v129, 0.0
    %v136 = vld [vmem:[%s3] sm:$0xf]
    %v137 = vld [vmem:[%s3 + $0x4] sm:$0xf]
    %v138 = vld [vmem:[%s3 + $0x8] sm:$0xf]
    %v139 = vld [vmem:[%s3 + $0xc] sm:$0xf]
    %v140 = vld [vmem:[%s4] sm:$0xff]
    %v141 = vld [vmem:[%s4 + $0x8] sm:$0xff]
    %v142 = vld [vmem:[%s4 + $0x10] sm:$0xff]
    %v143 = vld [vmem:[%s4 + $0x18] sm:$0xff]
    %v144 = vpack.c.bf16 %v133, %v132
    %v145 = vpack.c.bf16 %v135, %v134
    %147 = vset.pattern.permute.xlu0 0
    %148 = vperm.xlu0 %147, %v140
    %v149 = vpop.permute.xlu0 %148
    %152 = vset.pattern.permute.xlu0 0
    %153 = vperm.xlu0 %152, %v141
    %v154 = vpop.permute.xlu0 %153
    %157 = vset.pattern.permute.xlu0 0
    %158 = vperm.xlu0 %157, %v142
    %v159 = vpop.permute.xlu0 %158
    %162 = vset.pattern.permute.xlu0 0
    %163 = vperm.xlu0 %162, %v143
    %v164 = vpop.permute.xlu0 %163
    %v170 = vunpack.c.l.b16 %v136
    %v171 = vunpack.c.l.b16 %v137
    %v172 = vunpack.c.l.b16 %v138
    %v173 = vunpack.c.l.b16 %v139
    %v174 = vpack.c.b16 %v171, %v170
    %v175 = vpack.c.b16 %v173, %v172
    %vm176 = vcmask 261120
    %v178 = vsel %vm176, %v174, 0
    %v181 = vsel %vm176, %v175, 0
    %183 = vmatprep.subr.bf16.mxu0 0
    %184 = vmatpush1.bf16.msra.mxu0 %v144
    %185 = vmatprep.subr.bf16.mxu0 0
    %186 = vmatpush1.bf16.msra.mxu0 %v145
    %187 = vmatprep.subr.bf16.mxu0 0
    %188 = vmatpush1.bf16.msra.mxu0 0
    %189 = vmatprep.subr.bf16.mxu0 0
    %190 = vmatpush1.bf16.msra.mxu0 0
    %191 = vmatprep.subr.bf16.mxu0 0
    %192 = vmatpush1.bf16.msra.mxu0 0
    %193 = vmatprep.subr.bf16.mxu0 0
    %194 = vmatpush1.bf16.msra.mxu0 0
    %195 = vmatprep.subr.bf16.mxu0 0
    %196 = vmatpush1.bf16.msra.mxu0 0
    %197 = vmatprep.subr.bf16.mxu0 0
    %198 = vmatpush1.bf16.msra.mxu0 0
    %199 = vmatprep.subr.bf16.mxu0 0
    %200 = vmatpush1.bf16.msra.mxu0 0
    %201 = vmatprep.subr.bf16.mxu0 0
    %202 = vmatpush1.bf16.msra.mxu0 0
    %203 = vmatprep.subr.bf16.mxu0 0
    %204 = vmatpush1.bf16.msra.mxu0 0
    %205 = vmatprep.subr.bf16.mxu0 0
    %206 = vmatpush1.bf16.msra.mxu0 0
    %207 = vmatprep.subr.bf16.mxu0 0
    %208 = vmatpush1.bf16.msra.mxu0 0
    %209 = vmatprep.subr.bf16.mxu0 0
    %210 = vmatpush1.bf16.msra.mxu0 0
    %211 = vmatprep.subr.bf16.mxu0 0
    %212 = vmatpush1.bf16.msra.mxu0 0
    %213 = vmatprep.subr.bf16.mxu0 0
    %214 = vmatpush1.bf16.msra.mxu0 0
    %215 = vmatprep.mubr.bf16.mxu0 0
    %216 = vmatmul.mubr.bf16.gmra.mrb[0].mxu0 %v178
    %v217 = vpop.f32.mrb[0].mxu0
    %v218 = vadd.f32 %v149, %v217
    %v219 = vpop.f32.mrb[0].mxu0
    %v220 = vpop.f32.mrb[0].mxu0
    %v221 = vadd.f32 %v154, %v220
    %v222 = vpop.f32.mrb[0].mxu0
    %223 = vmatprep.mubr.bf16.mxu0 0
    %224 = vmatmul.mubr.bf16.gmra.mrb[0].mxu0 %v181
    %v225 = vpop.f32.mrb[0].mxu0
    %v226 = vadd.f32 %v159, %v225
    %v227 = vpop.f32.mrb[0].mxu0
    %v228 = vpop.f32.mrb[0].mxu0
    %v229 = vadd.f32 %v164, %v228
    %v230 = vpop.f32.mrb[0].mxu0
    %231 = vdwg.mxu0
    %v232 = vmax.f32 %v218, 0.0
    %v233 = vmax.f32 %v221, 0.0
    %v234 = vmax.f32 %v226, 0.0
    %v235 = vmax.f32 %v229, 0.0
    %v236 = vld [vmem:[%s5] sm:$0xff]
    %v237 = vld [vmem:[%s5 + $0x8] sm:$0xff]
    %v238 = vld [vmem:[%s5 + $0x10] sm:$0xff]
    %v239 = vld [vmem:[%s5 + $0x18] sm:$0xff]
    %v240 = vld [vmem:[#allocation2] sm:$0x1]
    %242 = vset.pattern.permute.xlu0 0
    %243 = vperm.xlu0 %242, %v236
    %v244 = vpop.permute.xlu0 %243
    %247 = vset.pattern.permute.xlu0 0
    %248 = vperm.xlu0 %247, %v237
    %v249 = vpop.permute.xlu0 %248
    %252 = vset.pattern.permute.xlu0 0
    %253 = vperm.xlu0 %252, %v238
    %v254 = vpop.permute.xlu0 %253
    %257 = vset.pattern.permute.xlu0 0
    %258 = vperm.xlu0 %257, %v239
    %v259 = vpop.permute.xlu0 %258
    %v261 = vmul.f32 %v232, %v244
    %v262 = vmul.f32 %v233, %v249
    %v263 = vmul.f32 %v234, %v254
    %v264 = vmul.f32 %v235, %v259
    %vm265 = vcmask 64512
    %v266 = vsel %vm265, %v261, 0.0
    %v267 = vsel %vm265, %v262, 0.0
    %v268 = vadd.f32 %v266, %v267
    %v269 = vsel %vm265, %v263, 0.0
    %v270 = vadd.f32 %v268, %v269
    %v271 = vsel %vm265, %v264, 0.0
    %v272 = vadd.f32 %v270, %v271
    %v273 = vrot.slane %v272, 4
    %v274 = vadd.f32 %v272, %v273
    %v275 = vrot.slane %v274, 2
    %v276 = vadd.f32 %v274, %v275
    %v277 = vrot.slane %v276, 1
    %v278 = vadd.f32 %v276, %v277
    %280 = vset.pattern.permute.xlu0 0
    %281 = vperm.xlu0 %280, %v240
    %v282 = vpop.permute.xlu0 %281
    %v284 = vlaneseq
    %v285 = vshrl.u32 %v284, 7
    %v286 = vsub.s32 0, %v285
    %v287 = vrot.slane %v282, %v286
    %v288 = vadd.f32 %v278, %v287
    %vm289 = vcmask 57344
    %290 = vst.msk [vmem:[#allocation3] sm:$0x1] %vm289, %v288
    // Predicated region
    $region30: #{tpu_custom_call.1} parent=1 // pred_check
      _
    $region31: #{tpu_custom_call.1} parent=1 // pred_check_branch
      %292 = sbr.rel (0) target = $region33
    $region32: #{tpu_custom_call.1} parent=1 // pred_region
      %s294 = ssub.s32 16, 16
      %295 = vsyncadd [#allocation4], %s294
      %s297 = sshll.u32 [#allocation3], 4
      %s298 = int_to_ptr.vmem [resolvable:$true] %s297
      %300 = dma.vmem_to_hbm [thread:$0]  %s298, 16, %s7, [#allocation4]
    $region33: #{tpu_custom_call.1} parent=1 // pred_fallthru
      _
    // Predicated region
    $region34: #{tpu_custom_call.1} parent=1 // pred_check
      _
    $region35: #{tpu_custom_call.1} parent=1 // pred_check_branch
      %302 = sbr.rel (0) target = $region37
    $region36: #{tpu_custom_call.1} parent=1 // pred_region
      %303 = dma.done [#allocation4], 16
    $region37: #{tpu_custom_call.1} parent=1 // pred_fallthru
      _
    %304 = vsyncpa [#allocation4], 1

</llo_original>
